<compile_context>
chip_gen: v6e
topology: v6e:2x2x1
jax: 0.10.0
libtpu: 0.0.40
codegen_flags: <defaults>
</compile_context>

<pallas_src>
import functools

import jax
import jax.numpy as jnp
from jax.experimental import pallas as pl
from jax.experimental.pallas import tpu as pltpu

HIGHEST = jax.lax.Precision.HIGHEST


def _round_up(v, m):
    return (v + m - 1) // m * m


def _vmem_budget_bytes():
    """~3/4 of physical per-core VMEM (v5e/v6e: 128 MiB, v7x: 64 MiB), capped."""
    cap = 64 * 1024 * 1024                       # conservative fallback (v7x)
    try:
        cap = int(pltpu.get_tpu_info().vmem_capacity_bytes)
    except Exception:
        pass
    return min(cap * 3 // 4, 96 * 1024 * 1024)


# ---------------------------------------------------------------------------
# Glue 1: restriction maps via per-node projections (perf review #1).
# ---------------------------------------------------------------------------
def predict_restriction_maps(x, row, col, sheaf_w):
    D = x.shape[1]
    w_row = sheaf_w[0, :D]
    w_col = sheaf_w[0, D:]
    z_row = jnp.dot(x, w_row, precision=HIGHEST)          # (N,)
    z_col = jnp.dot(x, w_col, precision=HIGHEST)          # (N,)
    return jnp.tanh(z_row[row] + z_col[col])               # (E,)


# ---------------------------------------------------------------------------
# Glue 2: dense normalised sheaf Laplacian, step_size folded in, built
# directly in the streaming dtype (no f32 Np^2 intermediate).
# NOTE: duplicate COO (row, col) entries are summed in out_dtype; exact when
# out_dtype == f32, within bf16 tolerance otherwise.
# TODO(synk): replace with an O(E) SpMM kernel driven by scalar-prefetched CSR
# row offsets (PrefetchScalarGridSpec) for large graphs.
# ---------------------------------------------------------------------------
def build_dense_laplacian(maps, row, col, right_idx, num_nodes, n_pad,
                          step_size, out_dtype):
    m = maps                                                # (E,)
    non_diag = -m * m[right_idx]                            # left_idx == arange(E)
    diag_maps = jnp.zeros((num_nodes,), jnp.float32).at[row].add(m * m)
    d_sqrt_inv = (diag_maps + 1.0) ** -0.5
    norm_maps = d_sqrt_inv[row] * non_diag * d_sqrt_inv[col]
    diag = d_sqrt_inv * diag_maps * d_sqrt_inv
    idx = jnp.arange(num_nodes)
    L = jnp.zeros((n_pad, n_pad), out_dtype)
    L = L.at[idx, idx].add((step_size * diag).astype(out_dtype))
    L = L.at[row, col].add((step_size * norm_maps).astype(out_dtype))
    return L                                                # padded cols/rows stay 0


# ---------------------------------------------------------------------------
# Pallas kernel: fused diffusion step
#   out(i) = x(i) - sum_k L(i,k) @ y(k)       (step_size already folded into L)
# Accumulates f32 directly into the resident output block (no scratch).
# ---------------------------------------------------------------------------
def _diffusion_kernel(x_ref, l_ref, y_ref, out_ref, *, y_resident):
    k = pl.program_id(1)

    @pl.when(k == 0)
    def _init():
        out_ref[...] = x_ref[...]

    if y_resident:
        tk = l_ref.shape[1]
        start = pl.multiple_of(k * tk, tk)
        y_k = y_ref[pl.ds(start, tk), :]
    else:
        y_k = y_ref[...]
    out_ref[...] -= jnp.dot(l_ref[...], y_k, preferred_element_type=jnp.float32)


def _choose_tiles(Np, Dp, itemsize, budget):
    """Pick (TM, TK, y_resident) for the diffusion kernel."""
    if Np <= 1024:
        # Tiny graphs: keep >=2 row tiles so the parallel axis can shard across
        # v7x's 2 TensorCores; stream the whole row of L per step.
        TM = 128 if Np >= 256 else Np // 2
        return TM, Np, True

    TM = 512
    y_resident = 2 * Np * Dp * itemsize <= budget // 3

    def est(tk):
        yb = 2 * Np * Dp * itemsize if y_resident else 2 * tk * Dp * itemsize
        return (2 * TM * tk * itemsize          # L tiles (double-buffered)
                + 2 * TM * Dp * 4               # x row tiles
                + 2 * TM * Dp * 4               # out row tiles
                + yb)                           # y (resident or streamed)

    cands = {4096, 2048, 1024, 512}
    if Np <= 4096:
        cands.add(Np)
    TK = 512
    for c in sorted(cands, reverse=True):
        if Np % c == 0 and est(c) <= budget:
            TK = c
            break
    return TM, TK, y_resident


def sheaf_conv_forward(x, edge_index, right_idx, lin_w, lin_b, sheaf_w,
                       step_size, num_nodes, compute_dtype=jnp.bfloat16):
    # TODO(synk): on v7x, stream L as fp8 (e4m3) with the same f32 accumulator
    # (entries are normalised and step_size-scaled) for ~2x on the HBM-bound path.
    N, D = x.shape
    assert N == num_nodes
    Dp = _round_up(D, 128)                                  # lane-dense feature dim
    Np = _round_up(N, 128) if N <= 1024 else _round_up(N, 512)

    itemsize = jnp.dtype(compute_dtype).itemsize
    budget = _vmem_budget_bytes()
    TM, TK, y_resident = _choose_tiles(Np, Dp, itemsize, budget)

    row, col = edge_index[0], edge_index[1]

    # 1) restriction maps
    maps = predict_restriction_maps(x, row, col, sheaf_w)

    # 2) dense normalised Laplacian (glue)
    L = build_dense_laplacian(maps, row, col, right_idx, num_nodes, Np,
                              step_size, compute_dtype)

    # 3) y = x @ W.T + b  (XLA; single small GEMM)
    x_p = jnp.zeros((Np, Dp), jnp.float32).at[:N, :D].set(x)
    wt_p = jnp.zeros((Dp, Dp), jnp.float32).at[:D, :D].set(lin_w.T)
    b_p = jnp.zeros((1, Dp), jnp.float32).at[0, :D].set(lin_b)
    y = (jnp.dot(x_p, wt_p, precision=HIGHEST,
                 preferred_element_type=jnp.float32) + b_p).astype(compute_dtype)
    # NB: padded rows of y equal the bias; benign because L's padded columns are
    # exactly zero — keep that invariant if padding or L construction changes.

    # 4) tiled fused diffusion: out = x - (step*L) @ y
    if y_resident:
        # Constant block index -> DMA'd once, stays resident across the grid.
        y_spec = pl.BlockSpec((Np, Dp), lambda i, k: (0, 0))
    else:
        # Large graphs (v7x VMEM pressure): stream y per k-tile instead.
        y_spec = pl.BlockSpec((TK, Dp), lambda i, k: (k, 0))

    est_vmem = (2 * TM * TK * itemsize
                + 2 * TM * Dp * 4
                + 2 * TM * Dp * 4
                + (2 * Np * Dp * itemsize if y_resident
                   else 2 * TK * Dp * itemsize))
    vmem_limit = int(min(budget, max(2 * est_vmem, 16 * 1024 * 1024)))

    out = pl.pallas_call(
        functools.partial(_diffusion_kernel, y_resident=y_resident),
        out_shape=jax.ShapeDtypeStruct((Np, Dp), jnp.float32),
        grid=(Np // TM, Np // TK),
        in_specs=[
            pl.BlockSpec((TM, Dp), lambda i, k: (i, 0)),    # x row tile (init only)
            pl.BlockSpec((TM, TK), lambda i, k: (i, k)),    # L tile (dominant stream)
            y_spec,
        ],
        out_specs=pl.BlockSpec((TM, Dp), lambda i, k: (i, 0)),
        compiler_params=pltpu.CompilerParams(
            dimension_semantics=("parallel", "arbitrary"),
            vmem_limit_bytes=vmem_limit),
    )(x_p, L, y)
    # TODO(synk): sweep pipeline_mode=pl.Buffered(3) on the L BlockSpec once tile
    # sizes are fixed (hides DMA jitter for a few % at one extra L tile of VMEM).
    return out[:N, :D]


# ---------------------------------------------------------------------------
# Pure-JAX reference (mirrors the PyTorch forward) for the correctness check.
# ---------------------------------------------------------------------------
def reference_forward(x, edge_index, right_idx, lin_w, lin_b, sheaf_w,
                      step_size, num_nodes):
    row, col = edge_index[0], edge_index[1]
    cat = jnp.concatenate([x[row], x[col]], axis=1)
    maps = jnp.tanh(jnp.dot(cat, sheaf_w.T, precision=HIGHEST))     # (E, 1)
    m = maps[:, 0]
    non_diag = -m * m[right_idx]
    diag_maps = jnp.zeros((num_nodes,), jnp.float32).at[row].add(m * m)
    d_sqrt_inv = (diag_maps + 1.0) ** -0.5
    norm_maps = d_sqrt_inv[row] * non_diag * d_sqrt_inv[col]
    diag = d_sqrt_inv * diag_maps * d_sqrt_inv
    idx = jnp.arange(num_nodes)
    L = jnp.zeros((num_nodes, num_nodes), jnp.float32)
    L = L.at[idx, idx].add(diag)
    L = L.at[row, col].add(norm_maps)
    y = jnp.dot(x, lin_w.T, precision=HIGHEST) + lin_b
    return x - step_size * jnp.dot(L, y, precision=HIGHEST)


if __name__ == "__main__":
    # ---- deterministic synthetic problem ----------------------------------
    N = 16          # num_nodes
    D = 32          # latent_dim == input_dim == output_dim
    step_size = 0.1

    # Symmetric ring graph: edges (i, i+1) and (i+1, i)  ->  E = 2N
    src, dst = [], []
    for i in range(N):
        j = (i + 1) % N
        src += [i, j]
        dst += [j, i]
    edge_index = jnp.array([src, dst], dtype=jnp.int32)             # (2, E)

    # compute_left_right_map_index: right_idx[e] = index of the reversed edge
    edge_to_idx = {(s, t): e for e, (s, t) in enumerate(zip(src, dst))}
    right_idx = jnp.array([edge_to_idx[(t, s)] for s, t in zip(src, dst)],
                          dtype=jnp.int32)

    key = jax.random.PRNGKey(0)
    k_x, k_w, k_b, k_s = jax.random.split(key, 4)
    x = jax.random.normal(k_x, (N, D), dtype=jnp.float32)
    lin_w = jax.random.normal(k_w, (D, D), dtype=jnp.float32) * 0.1
    lin_b = jax.random.normal(k_b, (D,), dtype=jnp.float32) * 0.1
    sheaf_w = jax.random.normal(k_s, (1, 2 * D), dtype=jnp.float32) * 0.1

    ref = reference_forward(x, edge_index, right_idx, lin_w, lin_b,
                            sheaf_w, step_size, N)

    # exact path: L / y streamed as f32
    out_f32 = sheaf_conv_forward(x, edge_index, right_idx, lin_w, lin_b,
                                 sheaf_w, step_size, N,
                                 compute_dtype=jnp.float32)
    out_f32 = jax.block_until_ready(out_f32)
    assert out_f32.shape == (N, D)
    assert jnp.allclose(out_f32, ref, atol=2e-4, rtol=2e-4), "f32 mismatch"

    # bandwidth-optimized path: L / y streamed as bf16, f32 accumulation
    out_bf16 = sheaf_conv_forward(x, edge_index, right_idx, lin_w, lin_b,
                                  sheaf_w, step_size, N,
                                  compute_dtype=jnp.bfloat16)
    out_bf16 = jax.block_until_ready(out_bf16)
    assert out_bf16.shape == (N, D)
    assert jnp.allclose(out_bf16, ref, atol=3e-2, rtol=3e-2), "bf16 mismatch"

    print("KERNEL_OK")
</pallas_src>

<mosaic_0001>
module attributes {stable_mosaic.version = 11 : i64} {
  func.func @_diffusion_kernel(%arg0: i32, %arg1: i32, %arg2: memref<64x128xf32, #tpu.memory_space<vmem>>, %arg3: memref<64x128xf32, #tpu.memory_space<vmem>>, %arg4: memref<128x128xf32, #tpu.memory_space<vmem>>, %arg5: memref<64x128xf32, #tpu.memory_space<vmem>>) attributes {dimension_semantics = [#tpu.dimension_semantics<parallel>, #tpu.dimension_semantics<arbitrary>], iteration_bounds = array<i64: 2, 1>, scalar_prefetch = 0 : i64, scratch_operands = 0 : i64, tpu.core_type = #tpu.core_type<tc>, window_params = [{transform_indices = @transform_0, window_bounds = array<i64: 64, 128>}, {transform_indices = @transform_1, window_bounds = array<i64: 64, 128>}, {pipeline_mode = #tpu.pipeline_mode<synchronous>, transform_indices = @transform_2, window_bounds = array<i64: 128, 128>}, {transform_indices = @transform_3, window_bounds = array<i64: 64, 128>}]} {
    %c0_i32 = arith.constant 0 : i32
    %0 = arith.cmpi eq, %arg1, %c0_i32 : i32
    %1 = arith.extui %0 : i1 to i32
    %c0_i32_0 = arith.constant 0 : i32
    %2 = arith.cmpi ne, %1, %c0_i32_0 : i32
    scf.if %2 {
      %c0_7 = arith.constant 0 : index
      %c0_8 = arith.constant 0 : index
      %12 = vector.load %arg2[%c0_7, %c0_8] : memref<64x128xf32, #tpu.memory_space<vmem>>, vector<64x128xf32>
      %c0_9 = arith.constant 0 : index
      %c0_10 = arith.constant 0 : index
      %13 = vector.load %arg5[%c0_9, %c0_10] : memref<64x128xf32, #tpu.memory_space<vmem>>, vector<64x128xf32>
      tpu.vector_store %arg5[%c0_9, %c0_10], %12 {strides = array<i32>} : memref<64x128xf32, #tpu.memory_space<vmem>>, vector<64x128xf32>,
    } else {
    }
    %c128_i32 = arith.constant 128 : i32
    %3 = arith.muli %arg1, %c128_i32 : i32
    %4 = tpu.assume_multiple %3, 128 : i32
    %5 = arith.index_cast %4 : i32 to index
    %c0 = arith.constant 0 : index
    %6 = vector.load %arg4[%5, %c0] : memref<128x128xf32, #tpu.memory_space<vmem>>, vector<128x128xf32>
    %c0_1 = arith.constant 0 : index
    %c0_2 = arith.constant 0 : index
    %7 = vector.load %arg5[%c0_1, %c0_2] : memref<64x128xf32, #tpu.memory_space<vmem>>, vector<64x128xf32>
    %c0_3 = arith.constant 0 : index
    %c0_4 = arith.constant 0 : index
    %8 = vector.load %arg3[%c0_3, %c0_4] : memref<64x128xf32, #tpu.memory_space<vmem>>, vector<64x128xf32>
    %cst = arith.constant dense<0.000000e+00> : vector<64x128xf32>
    %9 = tpu.matmul %8, %6, %cst {dimension_numbers = #tpu.dot_dimension_numbers<[1], [0], [0], [1], [0, 0, 1, 1], [], []>} : vector<64x128xf32>, vector<128x128xf32>, vector<64x128xf32> -> vector<64x128xf32>
    %10 = arith.subf %7, %9 : vector<64x128xf32>
    %c0_5 = arith.constant 0 : index
    %c0_6 = arith.constant 0 : index
    %11 = vector.load %arg5[%c0_5, %c0_6] : memref<64x128xf32, #tpu.memory_space<vmem>>, vector<64x128xf32>
    tpu.vector_store %arg5[%c0_5, %c0_6], %10 {strides = array<i32>} : memref<64x128xf32, #tpu.memory_space<vmem>>, vector<64x128xf32>,
    return
  }
  func.func @transform_0(%arg0: i32, %arg1: i32) -> (i32, i32) {
    %c0_i32 = arith.constant 0 : i32
    %c0_i32_0 = arith.constant 0 : i32
    return %arg0, %c0_i32 : i32, i32
  }
  func.func @transform_1(%arg0: i32, %arg1: i32) -> (i32, i32) {
    %c0_i32 = arith.constant 0 : i32
    return %arg0, %arg1 : i32, i32
  }
  func.func @transform_2(%arg0: i32, %arg1: i32) -> (i32, i32) {
    %c0_i32 = arith.constant 0 : i32
    %c0_i32_0 = arith.constant 0 : i32
    %c0_i32_1 = arith.constant 0 : i32
    return %c0_i32, %c0_i32_0 : i32, i32
  }
  func.func @transform_3(%arg0: i32, %arg1: i32) -> (i32, i32) {
    %c0_i32 = arith.constant 0 : i32
    %c0_i32_0 = arith.constant 0 : i32
    return %arg0, %c0_i32 : i32, i32
  }
}

</mosaic_0001>

<llo_original>
// kernel: tpu_custom_call.1
$region0: #{tpu_custom_call.1}
  #allocation0 [shape = 'u32[]', space=smem, size = 0x4, offset = 0x4, fixed_abs, tag = 'smem constant byte address 0x4 - core index']
  #allocation1 [shape = 'u32[144,128]{1,0:T(1,128)}', space=vmem, size = 0x12000, scoped, tag = 'internal scratch']
  %s0 = inlined_call_operand.hbm [shape: f32[128,128], index: 0, kind: input, shape index: {}]
  %s1 = inlined_call_operand.hbm [shape: f32[128,128], index: 1, kind: input, shape index: {}]
  %s2 = inlined_call_operand.hbm [shape: f32[128,128], index: 2, kind: input, shape index: {}]
  %s3 = inlined_call_operand.hbm [shape: f32[128,128], index: 3, kind: output, shape index: {}]
  %s4 = sld [smem:[#allocation0]]
  $region61: #{tpu_custom_call.1} parent=0
    _
  %s6 = ssub.s32 1, %s4
  %s7 = scalar_select 0, %s6, %s4
  $region1: #{tpu_custom_call.1} parent=0
    #allocation2 [shape = 'u8[65536]{0}', space=vmem, size = 0x10000, scoped, tag = 'input window, operand 0']
    #allocation3 [shape = 's32[2]{0}', space=sflag, size = 0x8, scoped, tag = 'scoped memory for tpu_custom_call.1']
    #allocation4 [shape = 's32[2]{0}', space=sflag, size = 0x8, scoped, tag = 'scoped memory for tpu_custom_call.1']
    #allocation5 [shape = 'u8[65536]{0}', space=vmem, size = 0x10000, scoped, tag = 'input window, operand 1']
    #allocation6 [shape = 's32[2]{0}', space=sflag, size = 0x8, scoped, tag = 'scoped memory for tpu_custom_call.1']
    #allocation7 [shape = 'u8[65536]{0}', space=vmem, size = 0x10000, scoped, tag = 'input window, operand 2, single buffered']
    #allocation8 [shape = 'u8[65536]{0}', space=vmem, size = 0x10000, scoped, tag = 'output window, operand 0']
    %8 = vsyncpa [#allocation3], 0
    %s9 = scalar_lea.sflag [#allocation3], 1
    %10 = vsyncpa %s9, 0
    %11 = vsyncpa [#allocation6], 0
    %s12 = scalar_lea.sflag [#allocation6], 1
    %13 = vsyncpa %s12, 0
    %14 = vsyncpa [#allocation4], 0
    %s15 = scalar_lea.sflag [#allocation4], 1
    %16 = vsyncpa %s15, 0
    loop: start=0, step=1, limit=4
    $region2: #{tpu_custom_call.1} parent=1 // loop_pre_header
      _
    $region3: #{tpu_custom_call.1} parent=1 // loop_header
      %s18 = sphi 0, %s22
      %p19 = scmp.ge.s32.totalorder %s18, 4
      %s25 = sphi 0, %s37
      %s26 = sphi 0, %s33
      %s27 = sphi 0, %s25
      %s28 = sphi 0, %s26
      %s29 = sphi 0, %s27
      %s30 = sphi 0, %s28
      %s40 = sphi 0, %s42
      %s43 = sphi 0, %s40
      %s44 = sphi 0, %s43
      %s60 = sphi 0, %s44
      %s68 = sphi 0, %s70
      %s71 = sphi 0, %s68
      %s72 = sphi 0, %s71
      %s88 = sphi 0, %s72
      %s92 = sphi 0, %s92
      %s94 = sphi 0, %s92
      %s95 = sphi 0, %s94
      %s109 = sphi 0, %s95
      %s115 = sphi 0, %s117
      %s118 = sphi 0, %s115
      %s119 = sphi 0, %s118
      %s135 = sphi 0, %s119
    $region4: #{tpu_custom_call.1} parent=1 // loop_header_branch
      %21 = sbr.rel (%p19) target = $region8
    $region5: #{tpu_custom_call.1} parent=1 // loop_body
      %s23 = ssub.s32 %s18, 1
      %s24 = ssub.s32 %s18, 2
      %s31 = sadd.s32 1, %s26
      %p32 = scmp.ge.s32.totalorder %s31, 1
      %s33 = scalar_select %p32, 0, %s31
      %s34 = sadd.s32 1, %s25
      %s35 = scalar_select %p32, %s34, %s25
      %p36 = scmp.ge.s32.totalorder %s35, 2
      %s37 = scalar_select %p36, 0, %s35
      %s38 = ssub.s32 %s25, %s37
      %p39 = scmp.eq.s32.totalorder %s38, 0
      %s41 = sadd.s32 %s40, 1
      %s42 = scalar_select %p39, %s40, %s41
      %p45 = pneg %p39
      %p46 = scmp.eq.s32.totalorder %s18, 1
      %p47 = por %p45, %p46
      %p48 = scmp.ne.s32.totalorder %s40, %s43
      %p49 = scmp.eq.s32.totalorder %s18, 0
      %p50 = por %p48, %p49
      %p51 = scmp.ne.s32.totalorder %s40, %s43
      %p52 = scmp.eq.s32.totalorder %s23, 1
      %p53 = por %p51, %p52
      %p54 = scmp.ne.s32.totalorder %s43, %s44
      %p55 = scmp.eq.s32.totalorder %s23, 0
      %p56 = por %p54, %p55
      %p57 = scmp.ne.s32.totalorder %s43, %s44
      %p58 = scmp.eq.s32.totalorder %s24, 1
      %p59 = por %p57, %p58
      %p61 = scmp.ne.s32.totalorder %s44, %s60
      %p62 = scmp.eq.s32.totalorder %s24, 0
      %p63 = por %p61, %p62
      %s64 = ssub.s32 %s25, %s37
      %s65 = ssub.s32 %s26, %s33
      %s66 = sor.u32 %s64, %s65
      %p67 = scmp.eq.s32.totalorder %s66, 0
      %s69 = sadd.s32 %s68, 1
      %s70 = scalar_select %p67, %s68, %s69
      %p73 = pneg %p67
      %p74 = scmp.eq.s32.totalorder %s18, 1
      %p75 = por %p73, %p74
      %p76 = scmp.ne.s32.totalorder %s68, %s71
      %p77 = scmp.eq.s32.totalorder %s18, 0
      %p78 = por %p76, %p77
      %p79 = scmp.ne.s32.totalorder %s68, %s71
      %p80 = scmp.eq.s32.totalorder %s23, 1
      %p81 = por %p79, %p80
      %p82 = scmp.ne.s32.totalorder %s71, %s72
      %p83 = scmp.eq.s32.totalorder %s23, 0
      %p84 = por %p82, %p83
      %p85 = scmp.ne.s32.totalorder %s71, %s72
      %p86 = scmp.eq.s32.totalorder %s24, 1
      %p87 = por %p85, %p86
      %p89 = scmp.ne.s32.totalorder %s72, %s88
      %p90 = scmp.eq.s32.totalorder %s24, 0
      %p91 = por %p89, %p90
      %s93 = sadd.s32 %s92, 1
      %p96 = scmp.eq.s32.totalorder %s18, 1
      %p97 = scmp.ne.s32.totalorder %s92, %s94
      %p98 = scmp.eq.s32.totalorder %s18, 0
      %p99 = por %p97, %p98
      %p100 = scmp.ne.s32.totalorder %s92, %s94
      %p101 = scmp.eq.s32.totalorder %s23, 1
      %p102 = por %p100, %p101
      %p103 = scmp.ne.s32.totalorder %s94, %s95
      %p104 = scmp.eq.s32.totalorder %s23, 0
      %p105 = por %p103, %p104
      %p106 = scmp.ne.s32.totalorder %s94, %s95
      %p107 = scmp.eq.s32.totalorder %s24, 1
      %p108 = por %p106, %p107
      %p110 = scmp.ne.s32.totalorder %s95, %s109
      %p111 = scmp.eq.s32.totalorder %s24, 0
      %p112 = por %p110, %p111
      %s113 = ssub.s32 %s25, %s37
      %p114 = scmp.eq.s32.totalorder %s113, 0
      %s116 = sadd.s32 %s115, 1
      %s117 = scalar_select %p114, %s115, %s116
      %p120 = pneg %p114
      %p121 = scmp.eq.s32.totalorder %s18, 1
      %p122 = por %p120, %p121
      %p123 = scmp.ne.s32.totalorder %s115, %s118
      %p124 = scmp.eq.s32.totalorder %s18, 0
      %p125 = por %p123, %p124
      %p126 = scmp.ne.s32.totalorder %s115, %s118
      %p127 = scmp.eq.s32.totalorder %s23, 1
      %p128 = por %p126, %p127
      %p129 = scmp.ne.s32.totalorder %s118, %s119
      %p130 = scmp.eq.s32.totalorder %s23, 0
      %p131 = por %p129, %p130
      %p132 = scmp.ne.s32.totalorder %s118, %s119
      %p133 = scmp.eq.s32.totalorder %s24, 1
      %p134 = por %p132, %p133
      %p136 = scmp.ne.s32.totalorder %s119, %s135
      %p137 = scmp.eq.s32.totalorder %s24, 0
      %p138 = por %p136, %p137
      %p139 = scmp.le.s32.totalorder 1, %s18
      %p140 = scmp.lt.s32.totalorder %s18, 3
      %p141 = pnand %p139, %p140
      %p142 = pneg %p141
      // Predicated region
      $region9: #{tpu_custom_call.1} parent=5 // pred_check
        _
      $region10: #{tpu_custom_call.1} parent=5 // pred_check_branch
        %144 = sbr.rel (%p141) target = $region12
      $region11: #{tpu_custom_call.1} parent=5 // pred_region
        %s145 = ssub.s32 %s18, 1
        // Predicated region
        $region13: #{tpu_custom_call.1} parent=11 // pred_check
          %p146 = pneg %p105
        $region14: #{tpu_custom_call.1} parent=11 // pred_check_branch
          %148 = sbr.rel (%p146) target = $region16
        $region15: #{tpu_custom_call.1} parent=11 // pred_region
          %s150 = ssub.s32 2048, 2048
          %151 = vsyncadd [#allocation6], %s150
          %s152 = sshll.u32 [#allocation7], 4
          %s153 = int_to_ptr.vmem [resolvable:$true] %s152
          %158 = dma.hbm_to_vmem [thread:$0]  %s2, 2048, %s153, [#allocation6], 128, 128, 8
        $region16: #{tpu_custom_call.1} parent=11 // pred_fallthru
          _
      $region12: #{tpu_custom_call.1} parent=5 // pred_fallthru
        _
      %p159 = scmp.lt.s32.totalorder %s18, 2
      // Predicated region
      $region17: #{tpu_custom_call.1} parent=5 // pred_check
        %p160 = pneg %p159
      $region18: #{tpu_custom_call.1} parent=5 // pred_check_branch
        %162 = sbr.rel (%p160) target = $region20
      $region19: #{tpu_custom_call.1} parent=5 // pred_region
        // Predicated region
        $region21: #{tpu_custom_call.1} parent=19 // pred_check
          %p163 = pneg %p50
        $region22: #{tpu_custom_call.1} parent=19 // pred_check_branch
          %165 = sbr.rel (%p163) target = $region24
        $region23: #{tpu_custom_call.1} parent=19 // pred_region
          %s166 = sand.u32 %s40, 1
          %s167 = scalar_lea.sflag [#allocation3], %s166
          %s168 = sand.u32 %s40, 1
          %s169 = smul.addr %s168, 64
          %s170 = scalar_lea.vmem [#allocation2], %s169
          %s171 = smul.u32 8, %s25
          %s173 = ssub.s32 1024, 1024
          %174 = vsyncadd %s167, %s173
          %s175 = smul.addr %s171, 128
          %s176 = scalar_lea.hbm %s0, %s175
          %s177 = sshll.u32 %s170, 4
          %s178 = int_to_ptr.vmem [resolvable:$true] %s177
          %183 = dma.hbm_to_vmem [thread:$0]  %s176, 1024, %s178, %s167, 128, 128, 8
        $region24: #{tpu_custom_call.1} parent=19 // pred_fallthru
          _
        // Predicated region
        $region25: #{tpu_custom_call.1} parent=19 // pred_check
          %p184 = pneg %p78
        $region26: #{tpu_custom_call.1} parent=19 // pred_check_branch
          %186 = sbr.rel (%p184) target = $region28
        $region27: #{tpu_custom_call.1} parent=19 // pred_region
          %s187 = sand.u32 %s18, 1
          %s188 = scalar_lea.sflag [#allocation6], %s187
          %s189 = sand.u32 %s68, 1
          %s190 = smul.addr %s189, 64
          %s191 = scalar_lea.vmem [#allocation5], %s190
          %s192 = smul.u32 8, %s25
          %s194 = ssub.s32 1024, 1024
          %195 = vsyncadd %s188, %s194
          %s196 = sadd.s32 %s26, %s192
          %s197 = smul.addr %s196, 128
          %s198 = scalar_lea.hbm %s1, %s197
          %s199 = sshll.u32 %s191, 4
          %s200 = int_to_ptr.vmem [resolvable:$true] %s199
          %205 = dma.hbm_to_vmem [thread:$0]  %s198, 1024, %s200, %s188, 128, 128, 8
        $region28: #{tpu_custom_call.1} parent=19 // pred_fallthru
          _
      $region20: #{tpu_custom_call.1} parent=5 // pred_fallthru
        _
      %p206 = scmp.le.s32.totalorder 1, %s18
      %p207 = scmp.lt.s32.totalorder %s18, 3
      %p208 = pnand %p206, %p207
      %p209 = pneg %p208
      // Predicated region
      $region29: #{tpu_custom_call.1} parent=5 // pred_check
        _
      $region30: #{tpu_custom_call.1} parent=5 // pred_check_branch
        %211 = sbr.rel (%p208) target = $region32
      $region31: #{tpu_custom_call.1} parent=5 // pred_region
        %s212 = ssub.s32 %s18, 1
        %s213 = sand.u32 %s43, 1
        %s214 = scalar_lea.sflag [#allocation3], %s213
        %s215 = sand.u32 %s43, 1
        %s216 = smul.addr %s215, 64
        %s217 = scalar_lea.vmem [#allocation2], %s216
        // Predicated region
        $region33: #{tpu_custom_call.1} parent=31 // pred_check
          %p218 = pneg %p56
        $region34: #{tpu_custom_call.1} parent=31 // pred_check_branch
          %220 = sbr.rel (%p218) target = $region36
        $region35: #{tpu_custom_call.1} parent=31 // pred_region
          %221 = dma.done %s214, 1024
        $region36: #{tpu_custom_call.1} parent=31 // pred_fallthru
          _
        %s222 = sand.u32 %s23, 1
        %s223 = scalar_lea.sflag [#allocation6], %s222
        %s224 = sand.u32 %s71, 1
        %s225 = smul.addr %s224, 64
        %s226 = scalar_lea.vmem [#allocation5], %s225
        // Predicated region
        $region37: #{tpu_custom_call.1} parent=31 // pred_check
          %p227 = pneg %p84
        $region38: #{tpu_custom_call.1} parent=31 // pred_check_branch
          %229 = sbr.rel (%p227) target = $region40
        $region39: #{tpu_custom_call.1} parent=31 // pred_region
          %230 = dma.done %s223, 1024
        $region40: #{tpu_custom_call.1} parent=31 // pred_fallthru
          _
        // Predicated region
        $region41: #{tpu_custom_call.1} parent=31 // pred_check
          %p231 = pneg %p105
        $region42: #{tpu_custom_call.1} parent=31 // pred_check_branch
          %233 = sbr.rel (%p231) target = $region44
        $region43: #{tpu_custom_call.1} parent=31 // pred_region
          %234 = dma.done [#allocation6], 2048
        $region44: #{tpu_custom_call.1} parent=31 // pred_fallthru
          _
        %s235 = sand.u32 %s43, 1
        %s236 = scalar_lea.sflag [#allocation3], %s235
        %s237 = sand.u32 %s43, 1
        %s238 = smul.addr %s237, 64
        %s239 = scalar_lea.vmem [#allocation2], %s238
        %p240 = pneg %p56
        %p241 = pneg %p53
        %s242 = sand.u32 %s23, 1
        %s243 = scalar_lea.sflag [#allocation6], %s242
        %s244 = sand.u32 %s71, 1
        %s245 = smul.addr %s244, 64
        %s246 = scalar_lea.vmem [#allocation5], %s245
        %p247 = pneg %p84
        %p248 = pneg %p81
        %p249 = pneg %p105
        %p250 = pneg %p102
        %p251 = pneg %p131
        %p252 = pneg %p128
        %s253 = sand.u32 %s118, 1
        %s254 = scalar_lea.sflag [#allocation4], %s253
        %s255 = sand.u32 %s118, 1
        %s256 = smul.addr %s255, 64
        %s257 = scalar_lea.vmem [#allocation8], %s256
        %s258 = smul.u32 8, %s27
        %s259 = smul.u32 8, %s27
        %s260 = smul.u32 8, %s27
        %p261 = scmp.eq.s32.totalorder %s28, 0
        // Predicated region
        $region45: #{tpu_custom_call.1} parent=31 // pred_check
          %p262 = pneg %p261
        $region46: #{tpu_custom_call.1} parent=31 // pred_check_branch
          %264 = sbr.rel (%p262) target = $region48
        $region47: #{tpu_custom_call.1} parent=31 // pred_region
          %v265 = vld [vmem:[%s217] sm:$0xff]
          %v266 = vld [vmem:[%s217 + $0x8] sm:$0xff]
          %v267 = vld [vmem:[%s217 + $0x10] sm:$0xff]
          %v268 = vld [vmem:[%s217 + $0x18] sm:$0xff]
          %v269 = vld [vmem:[%s217 + $0x20] sm:$0xff]
          %v270 = vld [vmem:[%s217 + $0x28] sm:$0xff]
          %v271 = vld [vmem:[%s217 + $0x30] sm:$0xff]
          %v272 = vld [vmem:[%s217 + $0x38] sm:$0xff]
          %273 = vst [vmem:[%s257] sm:$0xff] %v265
          %274 = vst [vmem:[%s257 + $0x8] sm:$0xff] %v266
          %275 = vst [vmem:[%s257 + $0x10] sm:$0xff] %v267
          %276 = vst [vmem:[%s257 + $0x18] sm:$0xff] %v268
          %277 = vst [vmem:[%s257 + $0x20] sm:$0xff] %v269
          %278 = vst [vmem:[%s257 + $0x28] sm:$0xff] %v270
          %279 = vst [vmem:[%s257 + $0x30] sm:$0xff] %v271
          %280 = vst [vmem:[%s257 + $0x38] sm:$0xff] %v272
        $region48: #{tpu_custom_call.1} parent=31 // pred_fallthru
          _
        %s281 = smul.u32 %s28, 128
        %s282 = scalar_lea.vmem [#allocation7], %s281
        %v283 = vld [vmem:[%s282] sm:$0xff]
        %v284 = vld [vmem:[%s282 + $0x8] sm:$0xff]
        %v285 = vld [vmem:[%s282 + $0x10] sm:$0xff]
        %v286 = vld [vmem:[%s282 + $0x18] sm:$0xff]
        %v287 = vld [vmem:[%s282 + $0x20] sm:$0xff]
        %v288 = vld [vmem:[%s282 + $0x28] sm:$0xff]
        %v289 = vld [vmem:[%s282 + $0x30] sm:$0xff]
        %v290 = vld [vmem:[%s282 + $0x38] sm:$0xff]
        %v291 = vld [vmem:[%s282 + $0x40] sm:$0xff]
        %v292 = vld [vmem:[%s282 + $0x48] sm:$0xff]
        %v293 = vld [vmem:[%s282 + $0x50] sm:$0xff]
        %v294 = vld [vmem:[%s282 + $0x58] sm:$0xff]
        %v295 = vld [vmem:[%s282 + $0x60] sm:$0xff]
        %v296 = vld [vmem:[%s282 + $0x68] sm:$0xff]
        %v297 = vld [vmem:[%s282 + $0x70] sm:$0xff]
        %v298 = vld [vmem:[%s282 + $0x78] sm:$0xff]
        %v299 = vld [vmem:[%s257] sm:$0xff]
        %v300 = vld [vmem:[%s257 + $0x8] sm:$0xff]
        %v301 = vld [vmem:[%s257 + $0x10] sm:$0xff]
        %v302 = vld [vmem:[%s257 + $0x18] sm:$0xff]
        %v303 = vld [vmem:[%s257 + $0x20] sm:$0xff]
        %v304 = vld [vmem:[%s257 + $0x28] sm:$0xff]
        %v305 = vld [vmem:[%s257 + $0x30] sm:$0xff]
        %v306 = vld [vmem:[%s257 + $0x38] sm:$0xff]
        %v307 = vld [vmem:[%s226] sm:$0xff]
        %v308 = vld [vmem:[%s226 + $0x8] sm:$0xff]
        %v309 = vld [vmem:[%s226 + $0x10] sm:$0xff]
        %v310 = vld [vmem:[%s226 + $0x18] sm:$0xff]
        %v311 = vld [vmem:[%s226 + $0x20] sm:$0xff]
        %v312 = vld [vmem:[%s226 + $0x28] sm:$0xff]
        %v313 = vld [vmem:[%s226 + $0x30] sm:$0xff]
        %v314 = vld [vmem:[%s226 + $0x38] sm:$0xff]
        %315 = vmatprep.subr.mxu0 0.0
        %316 = vmatpush1.msra.mxu0 %v298
        %317 = vmatprep.subr.mxu0 0.0
        %318 = vmatpush1.msra.mxu0 %v297
        %319 = vmatprep.subr.mxu0 0.0
        %320 = vmatpush1.msra.mxu0 %v296
        %321 = vmatprep.subr.mxu0 0.0
        %322 = vmatpush1.msra.mxu0 %v295
        %323 = vmatprep.subr.mxu0 0.0
        %324 = vmatpush1.msra.mxu0 %v294
        %325 = vmatprep.subr.mxu0 0.0
        %326 = vmatpush1.msra.mxu0 %v293
        %327 = vmatprep.subr.mxu0 0.0
        %328 = vmatpush1.msra.mxu0 %v292
        %329 = vmatprep.subr.mxu0 0.0
        %330 = vmatpush1.msra.mxu0 %v291
        %331 = vmatprep.subr.mxu0 0.0
        %332 = vmatpush1.msra.mxu0 %v290
        %333 = vmatprep.subr.mxu0 0.0
        %334 = vmatpush1.msra.mxu0 %v289
        %335 = vmatprep.subr.mxu0 0.0
        %336 = vmatpush1.msra.mxu0 %v288
        %337 = vmatprep.subr.mxu0 0.0
        %338 = vmatpush1.msra.mxu0 %v287
        %339 = vmatprep.subr.mxu0 0.0
        %340 = vmatpush1.msra.mxu0 %v286
        %341 = vmatprep.subr.mxu0 0.0
        %342 = vmatpush1.msra.mxu0 %v285
        %343 = vmatprep.subr.mxu0 0.0
        %344 = vmatpush1.msra.mxu0 %v284
        %345 = vmatprep.subr.mxu0 0.0
        %346 = vmatpush1.msra.mxu0 %v283
        %347 = vmatprep.subr.mxu0 0.0
        %348 = vmatpush2.msra.mxu0 0.0
        %349 = vmatprep.subr.mxu0 0.0
        %350 = vmatpush2.msra.mxu0 0.0
        %351 = vmatprep.subr.mxu0 0.0
        %352 = vmatpush2.msra.mxu0 0.0
        %353 = vmatprep.subr.mxu0 0.0
        %354 = vmatpush2.msra.mxu0 0.0
        %355 = vmatprep.subr.mxu0 0.0
        %356 = vmatpush2.msra.mxu0 0.0
        %357 = vmatprep.subr.mxu0 0.0
        %358 = vmatpush2.msra.mxu0 0.0
        %359 = vmatprep.subr.mxu0 0.0
        %360 = vmatpush2.msra.mxu0 0.0
        %361 = vmatprep.subr.mxu0 0.0
        %362 = vmatpush2.msra.mxu0 0.0
        %363 = vmatprep.subr.mxu0 0.0
        %364 = vmatpush2.msra.mxu0 0.0
        %365 = vmatprep.subr.mxu0 0.0
        %366 = vmatpush2.msra.mxu0 0.0
        %367 = vmatprep.subr.mxu0 0.0
        %368 = vmatpush2.msra.mxu0 0.0
        %369 = vmatprep.subr.mxu0 0.0
        %370 = vmatpush2.msra.mxu0 0.0
        %371 = vmatprep.subr.mxu0 0.0
        %372 = vmatpush2.msra.mxu0 0.0
        %373 = vmatprep.subr.mxu0 0.0
        %374 = vmatpush2.msra.mxu0 0.0
        %375 = vmatprep.subr.mxu0 0.0
        %376 = vmatpush2.msra.mxu0 0.0
        %377 = vmatprep.subr.mxu0 0.0
        %378 = vmatpush2.msra.mxu0 0.0
        %379 = vmatprep.mubr.f32.mxu0 0.0
        %380 = vmatmul.mubr.f32.gmra.mxu0 %v307
        %v381 = vpop.f32.mrf.mxu0
        %v382 = vadd.f32 0.0, %v381
        %v383 = vpop.f32.mrf.mxu0
        %384 = vmatprep.mubr.f32.mxu0 0.0
        %385 = vmatmul.mubr.f32.gmra.mxu0 %v308
        %v386 = vpop.f32.mrf.mxu0
        %v387 = vadd.f32 0.0, %v386
        %v388 = vpop.f32.mrf.mxu0
        %389 = vmatprep.mubr.f32.mxu0 0.0
        %390 = vmatmul.mubr.f32.gmra.mxu0 %v309
        %v391 = vpop.f32.mrf.mxu0
        %v392 = vadd.f32 0.0, %v391
        %v393 = vpop.f32.mrf.mxu0
        %394 = vmatprep.mubr.f32.mxu0 0.0
        %395 = vmatmul.mubr.f32.gmra.mxu0 %v310
        %v396 = vpop.f32.mrf.mxu0
        %v397 = vadd.f32 0.0, %v396
        %v398 = vpop.f32.mrf.mxu0
        %399 = vmatprep.mubr.f32.mxu0 0.0
        %400 = vmatmul.mubr.f32.gmra.mxu0 %v311
        %v401 = vpop.f32.mrf.mxu0
        %v402 = vadd.f32 0.0, %v401
        %v403 = vpop.f32.mrf.mxu0
        %404 = vmatprep.mubr.f32.mxu0 0.0
        %405 = vmatmul.mubr.f32.gmra.mxu0 %v312
        %v406 = vpop.f32.mrf.mxu0
        %v407 = vadd.f32 0.0, %v406
        %v408 = vpop.f32.mrf.mxu0
        %409 = vmatprep.mubr.f32.mxu0 0.0
        %410 = vmatmul.mubr.f32.gmra.mxu0 %v313
        %v411 = vpop.f32.mrf.mxu0
        %v412 = vadd.f32 0.0, %v411
        %v413 = vpop.f32.mrf.mxu0
        %414 = vmatprep.mubr.f32.mxu0 0.0
        %415 = vmatmul.mubr.f32.gmra.mxu0 %v314
        %v416 = vpop.f32.mrf.mxu0
        %v417 = vadd.f32 0.0, %v416
        %v418 = vpop.f32.mrf.mxu0
        %419 = vdwg.mxu0
        %v420 = vsub.f32 %v299, %v382
        %v421 = vsub.f32 %v300, %v387
        %v422 = vsub.f32 %v301, %v392
        %v423 = vsub.f32 %v302, %v397
        %v424 = vsub.f32 %v303, %v402
        %v425 = vsub.f32 %v304, %v407
        %v426 = vsub.f32 %v305, %v412
        %v427 = vsub.f32 %v306, %v417
        %428 = vst [vmem:[%s257] sm:$0xff] %v420
        %429 = vst [vmem:[%s257 + $0x8] sm:$0xff] %v421
        %430 = vst [vmem:[%s257 + $0x10] sm:$0xff] %v422
        %431 = vst [vmem:[%s257 + $0x18] sm:$0xff] %v423
        %432 = vst [vmem:[%s257 + $0x20] sm:$0xff] %v424
        %433 = vst [vmem:[%s257 + $0x28] sm:$0xff] %v425
        %434 = vst [vmem:[%s257 + $0x30] sm:$0xff] %v426
        %435 = vst [vmem:[%s257 + $0x38] sm:$0xff] %v427
        %s436 = sand.u32 %s118, 1
        %s437 = scalar_lea.sflag [#allocation4], %s436
        %s438 = sand.u32 %s118, 1
        %s439 = smul.addr %s438, 64
        %s440 = scalar_lea.vmem [#allocation8], %s439
        // Predicated region
        $region49: #{tpu_custom_call.1} parent=31 // pred_check
          %p441 = pneg %p128
        $region50: #{tpu_custom_call.1} parent=31 // pred_check_branch
          %443 = sbr.rel (%p441) target = $region52
        $region51: #{tpu_custom_call.1} parent=31 // pred_region
          %s444 = smul.u32 8, %s27
          %s446 = ssub.s32 1024, 1024
          %447 = vsyncadd %s437, %s446
          %s448 = smul.addr %s444, 128
          %s449 = scalar_lea.hbm %s3, %s448
          %s450 = sshll.u32 %s440, 4
          %s451 = int_to_ptr.vmem [resolvable:$true] %s450
          %456 = dma.vmem_to_hbm [thread:$0]  %s451, 1024, %s449, %s437, 128, 128, 8
        $region52: #{tpu_custom_call.1} parent=31 // pred_fallthru
          _
      $region32: #{tpu_custom_call.1} parent=5 // pred_fallthru
        _
      %p457 = scmp.le.s32.totalorder 2, %s18
      // Predicated region
      $region53: #{tpu_custom_call.1} parent=5 // pred_check
        %p458 = pneg %p457
      $region54: #{tpu_custom_call.1} parent=5 // pred_check_branch
        %460 = sbr.rel (%p458) target = $region56
      $region55: #{tpu_custom_call.1} parent=5 // pred_region
        %s461 = ssub.s32 %s18, 2
        // Predicated region
        $region57: #{tpu_custom_call.1} parent=55 // pred_check
          %p462 = pneg %p134
        $region58: #{tpu_custom_call.1} parent=55 // pred_check_branch
          %464 = sbr.rel (%p462) target = $region60
        $region59: #{tpu_custom_call.1} parent=55 // pred_region
          %s465 = sand.u32 %s119, 1
          %s466 = scalar_lea.sflag [#allocation4], %s465
          %s467 = sand.u32 %s119, 1
          %s468 = smul.addr %s467, 64
          %s469 = scalar_lea.vmem [#allocation8], %s468
          %470 = dma.done %s466, 1024
        $region60: #{tpu_custom_call.1} parent=55 // pred_fallthru
          _
      $region56: #{tpu_custom_call.1} parent=5 // pred_fallthru
        _
    $region6: #{tpu_custom_call.1} parent=1 // loop_footer
      %s22 = sadd.s32 1, %s18
    $region7: #{tpu_custom_call.1} parent=1 // loop_footer_branch
      %17 = sbr.rel target = $region3
    $region8: #{tpu_custom_call.1} parent=1 // loop_exit
      _
    %471 = vsyncpa [#allocation3], 1
    %s472 = scalar_lea.sflag [#allocation3], 1
    %473 = vsyncpa %s472, 1
    %474 = vsyncpa [#allocation6], 1
    %s475 = scalar_lea.sflag [#allocation6], 1
    %476 = vsyncpa %s475, 1
    %477 = vsyncpa [#allocation4], 1
    %s478 = scalar_lea.sflag [#allocation4], 1
    %479 = vsyncpa %s478, 1

</llo_original>
